<compile_context>
chip_gen: v7x
topology: tpu7x:2x2x1
jax: 0.10.0
libtpu: 0.0.40
codegen_flags: <defaults>
</compile_context>

<pallas_src>
import functools

import jax
import jax.numpy as jnp
from jax.experimental import pallas as pl
from jax.experimental.pallas import tpu as pltpu

LANES = 128
ACC_ROWS = 8                    # (8, 128) f32 accumulator = one vreg
TARGET_BLOCK_BYTES = 4 << 20    # ~4 MiB per operand per pipeline buffer


def _round_up(a, b):
    return ((a + b - 1) // b) * b


def _num_tensorcores():
    """Best-effort TensorCore count (1 on v5e/v6e, 2 on v7x)."""
    try:
        info = pltpu.get_tpu_info()
        for name in ("num_cores", "core_count", "cores_per_chip",
                     "num_tensorcores", "tensorcore_count"):
            v = getattr(info, name, None)
            if v:
                return min(2, max(1, int(v)))
    except Exception:
        pass
    try:
        v = getattr(jax.devices()[0], "num_cores", None)
        if v:
            return min(2, max(1, int(v)))
    except Exception:
        pass
    return 1


def _mse_sum_kernel(x_ref, t_ref, out_ref, acc_ref, *, block_rows,
                    tiles_per_split, tiles_total, rows_total,
                    rows_ragged, has_dups):
    """Per-split sum((x - t)^2), accumulated in a single-vreg f32 scratch."""
    s = pl.program_id(0)   # split (TensorCore) index
    j = pl.program_id(1)   # tile index within the split

    @pl.when(j == 0)
    def _():
        acc_ref[...] = jnp.zeros_like(acc_ref)

    logical_tile = s * tiles_per_split + j

    def accumulate(mask_rows):
        d = x_ref[...].astype(jnp.float32) - t_ref[...].astype(jnp.float32)
        sq = d * d
        if mask_rows:
            # Select (NOT multiply-by-mask) so NaN/Inf garbage in the partial
            # edge block is discarded.
            row_ids = jax.lax.broadcasted_iota(jnp.int32, sq.shape, 0)
            valid = (row_ids + logical_tile * block_rows) < rows_total
            sq = jnp.where(valid, sq, 0.0)
        if block_rows % ACC_ROWS == 0:
            # Fold rows into the (8,128) accumulator with pure VPU adds; the
            # reshape groups whole (8,128) tiles so it is layout-preserving.
            acc_ref[...] += sq.reshape(block_rows // ACC_ROWS, ACC_ROWS,
                                       LANES).sum(axis=0)
        else:
            # Tiny single-tile inputs whose row count is not a multiple of 8.
            acc_ref[0:1, :] += jnp.sum(sq, axis=0, keepdims=True)

    if not rows_ragged and not has_dups:
        # Clean hot path: no iota / compare / select anywhere in the sweep.
        accumulate(False)
    elif rows_ragged:
        @pl.when(logical_tile < tiles_total - 1)     # interior tiles
        def _():
            accumulate(False)

        @pl.when(logical_tile == tiles_total - 1)    # last real tile (ragged)
        def _():
            accumulate(True)
        # logical_tile >= tiles_total (clamped duplicates): skipped entirely.
    else:
        @pl.when(logical_tile < tiles_total)         # only skip duplicates
        def _():
            accumulate(False)

    @pl.when(j == pl.num_programs(1) - 1)
    def _():
        out_ref[0, 0] = jnp.sum(acc_ref[...])


def _mse_block_sums(x2d, t2d, num_splits, core_parallel, n_buffers):
    """sum((x2d - t2d)^2) over a lane-dense [rows, 128] view via pallas_call."""
    rows_total, lanes = x2d.shape
    assert lanes == LANES
    itemsize = jnp.dtype(x2d.dtype).itemsize

    # Dtype-aware sublane packing (f32: 8, bf16: 16, int8/fp8: 32).
    pack = max(8, 32 // max(1, itemsize))
    max_rows = (TARGET_BLOCK_BYTES // (LANES * itemsize)) // pack * pack
    # Full-dim block for small inputs (always a legal block shape), otherwise
    # a pack-aligned ~4 MiB streaming block.
    block_rows = min(rows_total, max_rows)

    tiles_total = pl.cdiv(rows_total, block_rows)
    tiles_per_split = pl.cdiv(tiles_total, num_splits)
    rows_ragged = (rows_total % block_rows) != 0
    has_dups = (num_splits * tiles_per_split) != tiles_total

    if has_dups:
        def in_map(s, j):
            # Clamp so out-of-range logical tiles re-read a valid block; their
            # compute is skipped inside the kernel.
            return (jnp.minimum(s * tiles_per_split + j, tiles_total - 1), 0)
    else:
        def in_map(s, j):
            return (s * tiles_per_split + j, 0)

    spec_kwargs = {}
    if n_buffers is not None and n_buffers != 2:
        spec_kwargs["pipeline_mode"] = pl.Buffered(n_buffers)
    in_specs = [pl.BlockSpec((block_rows, LANES), in_map, **spec_kwargs)
                for _ in range(2)]

    kernel = functools.partial(
        _mse_sum_kernel,
        block_rows=block_rows, tiles_per_split=tiles_per_split,
        tiles_total=tiles_total, rows_total=rows_total,
        rows_ragged=rows_ragged, has_dups=has_dups)

    if core_parallel:
        # v7x: genuinely shard the leading axis across the two TensorCores so
        # both drive HBM (the plain "parallel" string does not).
        semantics = (pltpu.CORE_PARALLEL, pltpu.ARBITRARY)
    else:
        semantics = ("arbitrary", "arbitrary")

    n_buf = n_buffers if n_buffers else 2
    block_bytes = block_rows * LANES * itemsize
    # Enough for 2 operands x n_buf buffers + accumulator + Mosaic internals;
    # stays below v7x's 64 MiB per-core physical VMEM.
    vmem_limit = int(min(48 << 20,
                         max(32 << 20, 2 * n_buf * block_bytes + (8 << 20))))

    partials = pl.pallas_call(
        kernel,
        out_shape=jax.ShapeDtypeStruct((num_splits, 1), jnp.float32),
        grid_spec=pltpu.PrefetchScalarGridSpec(
            num_scalar_prefetch=0,
            grid=(num_splits, tiles_per_split),
            in_specs=in_specs,
            out_specs=pl.BlockSpec((1, 1), lambda s, j: (s, 0),
                                   memory_space=pltpu.SMEM),
            scratch_shapes=[pltpu.VMEM((ACC_ROWS, LANES), jnp.float32)],
        ),
        compiler_params=pltpu.CompilerParams(
            dimension_semantics=semantics,
            vmem_limit_bytes=vmem_limit,
        ),
    )(x2d, t2d)
    return jnp.sum(partials)


@functools.partial(
    jax.jit,
    static_argnames=("strength", "num_splits", "core_parallel", "n_buffers"))
def _loss_impl(x, target, strength, num_splits, core_parallel, n_buffers):
    n_elems = x.size
    flat_x = x.reshape(-1)          # bitcast, no copy
    flat_t = target.reshape(-1)
    main = (n_elems // LANES) * LANES

    total = jnp.float32(0.0)
    if main < n_elems:
        # Ragged tail (< 128 elements): negligible, computed directly in JAX
        # instead of padding both full operands (which would ~2x HBM traffic).
        dt = (flat_x[main:].astype(jnp.float32)
              - flat_t[main:].astype(jnp.float32))
        total = total + jnp.sum(dt * dt)
    if main > 0:
        if main == n_elems:
            x2d = flat_x.reshape(main // LANES, LANES)   # free bitcast
            t2d = flat_t.reshape(main // LANES, LANES)
        else:
            # TODO(synk): slicing the lane-aligned prefix may materialize a
            # copy for non-128-divisible element counts; rare for conv maps.
            x2d = flat_x[:main].reshape(main // LANES, LANES)
            t2d = flat_t[:main].reshape(main // LANES, LANES)
        total = total + _mse_block_sums(x2d, t2d, num_splits, core_parallel,
                                        n_buffers)

    # MSELoss(reduction='mean') * strength.  GradsScale (`normalize`) only
    # rescales gradients in the backward pass; forward is identity.
    return (total / jnp.float32(n_elems)) * jnp.float32(strength)


_GOOD_CFG = None


def _candidate_configs():
    cores = _num_tensorcores()
    cfgs = []
    if cores > 1:
        cfgs.append((cores, True, 3))   # core-parallel + triple-buffered
        cfgs.append((cores, True, 2))   # core-parallel, default buffering
    cfgs.append((1, False, 3))          # single core, triple-buffered
    cfgs.append((1, False, 2))          # most conservative build
    return cfgs


def loss_content_forward(x, target, strength):
    """Pallas implementation of LossContent.forward in 'loss' mode.

    Returns (input, loss) with loss = mean((x - target)^2) * strength; the
    input is passed through unchanged (matching the PyTorch forward).
    """
    global _GOOD_CFG
    assert x.shape == target.shape
    if x.size == 0:
        # torch MSELoss(reduction='mean') over zero elements is NaN.
        return x, jnp.float32(float("nan"))

    cfgs = [_GOOD_CFG] if _GOOD_CFG is not None else _candidate_configs()
    last_err = None
    for num_splits, core_parallel, n_buffers in cfgs:
        try:
            loss = _loss_impl(x, target, strength=float(strength),
                              num_splits=num_splits,
                              core_parallel=core_parallel,
                              n_buffers=n_buffers)
            _GOOD_CFG = (num_splits, core_parallel, n_buffers)
            return x, loss
        except Exception as err:   # fall back to a more conservative build
            last_err = err
    raise last_err


class LossContentPallas:
    """Mirror of the PyTorch LossContent module (forward only)."""

    def __init__(self, strength, normalize):
        self.strength = float(strength)
        # TODO(synk): `normalize` (GradsScale) only rescales gradients in the
        # backward pass; the forward pass is identity, so it is a no-op here.
        self.normalize = normalize
        self.mode = "None"
        self.target = None
        self.loss = None

    def forward(self, x):
        if self.mode == "loss":
            x, loss = loss_content_forward(x, self.target, self.strength)
            self.loss = loss
        elif self.mode == "capture":
            self.target = jax.lax.stop_gradient(x)
        return x


if __name__ == "__main__":
    key = jax.random.PRNGKey(0)
    k1, k2 = jax.random.split(key)

    # Small NCHW input consistent with a conv-feature content loss.
    x = jax.random.normal(k1, (2, 4, 16, 16), dtype=jnp.float32)
    content = jax.random.normal(k2, (2, 4, 16, 16), dtype=jnp.float32)

    mod = LossContentPallas(strength=1.5, normalize=True)

    # mode='None': pure passthrough
    out_none = mod.forward(x)

    # mode='capture': store target
    mod.mode = "capture"
    mod.forward(content)

    # mode='loss': compute MSE * strength in the Pallas kernel
    mod.mode = "loss"
    out = mod.forward(x)

    out = jax.block_until_ready(out)
    loss = jax.block_until_ready(mod.loss)

    # Reference check in plain JAX
    ref_loss = jnp.mean((x - content) ** 2) * 1.5
    assert jnp.allclose(out, x), "forward must pass input through unchanged"
    assert jnp.allclose(loss, ref_loss, rtol=1e-5, atol=1e-6), (loss, ref_loss)

    print("KERNEL_OK")
</pallas_src>

<mosaic_0001>
module attributes {stable_mosaic.version = 11 : i64} {
  func.func @_mse_sum_kernel(%arg0: i32, %arg1: i32, %arg2: memref<16x128xf32, #tpu.memory_space<vmem>>, %arg3: memref<16x128xf32, #tpu.memory_space<vmem>>, %arg4: memref<1x1xf32, #tpu.memory_space<smem>>, %arg5: memref<8x128xf32, #tpu.memory_space<vmem>>) attributes {dimension_semantics = [#tpu.dimension_semantics<arbitrary>, #tpu.dimension_semantics<arbitrary>], iteration_bounds = array<i64: 1, 1>, scalar_prefetch = 0 : i64, scratch_operands = 1 : i64, tpu.core_type = #tpu.core_type<tc>, window_params = [{transform_indices = @transform_0, window_bounds = array<i64: 16, 128>}, {transform_indices = @transform_1, window_bounds = array<i64: 16, 128>}, {transform_indices = @transform_2, window_bounds = array<i64: 1, 1>}]} {
    %c0_i32 = arith.constant 0 : i32
    %0 = arith.cmpi eq, %arg1, %c0_i32 : i32
    %1 = arith.extui %0 : i1 to i32
    %c0_i32_0 = arith.constant 0 : i32
    %2 = arith.cmpi ne, %1, %c0_i32_0 : i32
    scf.if %2 {
      %cst_10 = arith.constant 0.000000e+00 : f32
      %15 = vector.broadcast %cst_10 : f32 to vector<8x128xf32>
      %c0_11 = arith.constant 0 : index
      %c0_12 = arith.constant 0 : index
      %16 = vector.load %arg5[%c0_11, %c0_12] : memref<8x128xf32, #tpu.memory_space<vmem>>, vector<8x128xf32>
      tpu.vector_store %arg5[%c0_11, %c0_12], %15 {strides = array<i32>} : memref<8x128xf32, #tpu.memory_space<vmem>>, vector<8x128xf32>,
    } else {
    }
    %c0 = arith.constant 0 : index
    %c0_1 = arith.constant 0 : index
    %3 = vector.load %arg2[%c0, %c0_1] : memref<16x128xf32, #tpu.memory_space<vmem>>, vector<16x128xf32>
    %c0_2 = arith.constant 0 : index
    %c0_3 = arith.constant 0 : index
    %4 = vector.load %arg3[%c0_2, %c0_3] : memref<16x128xf32, #tpu.memory_space<vmem>>, vector<16x128xf32>
    %5 = arith.subf %3, %4 : vector<16x128xf32>
    %6 = arith.mulf %5, %5 : vector<16x128xf32>
    %c0_4 = arith.constant 0 : index
    %c0_5 = arith.constant 0 : index
    %7 = vector.load %arg5[%c0_4, %c0_5] : memref<8x128xf32, #tpu.memory_space<vmem>>, vector<8x128xf32>
    %8 = vector.shape_cast %6 : vector<16x128xf32> to vector<2x8x128xf32>
    %cst = arith.constant dense<0.000000e+00> : vector<8x128xf32>
    %9 = vector.multi_reduction <add>, %8, %cst [0] : vector<2x8x128xf32> to vector<8x128xf32>
    %10 = arith.addf %7, %9 : vector<8x128xf32>
    %c0_6 = arith.constant 0 : index
    %c0_7 = arith.constant 0 : index
    %11 = vector.load %arg5[%c0_6, %c0_7] : memref<8x128xf32, #tpu.memory_space<vmem>>, vector<8x128xf32>
    tpu.vector_store %arg5[%c0_6, %c0_7], %10 {strides = array<i32>} : memref<8x128xf32, #tpu.memory_space<vmem>>, vector<8x128xf32>,
    %c0_i32_8 = arith.constant 0 : i32
    %12 = arith.cmpi eq, %arg1, %c0_i32_8 : i32
    %13 = arith.extui %12 : i1 to i32
    %c0_i32_9 = arith.constant 0 : i32
    %14 = arith.cmpi ne, %13, %c0_i32_9 : i32
    scf.if %14 {
      %c0_10 = arith.constant 0 : index
      %c0_11 = arith.constant 0 : index
      %15 = vector.load %arg5[%c0_10, %c0_11] : memref<8x128xf32, #tpu.memory_space<vmem>>, vector<8x128xf32>
      %16 = vector.shape_cast %15 : vector<8x128xf32> to vector<1x8x128xf32>
      %cst_12 = arith.constant dense<0.000000e+00> : vector<1xf32>
      %17 = vector.multi_reduction <add>, %16, %cst_12 [1, 2] : vector<1x8x128xf32> to vector<1xf32>
      %18 = vector.shape_cast %17 : vector<1xf32> to vector<1x1x1xf32>
      %19 = vector.extract %18[0, 0, 0] : f32 from vector<1x1x1xf32>
      %c0_13 = arith.constant 0 : index
      %c0_14 = arith.constant 0 : index
      %20 = memref.load %arg4[%c0_13, %c0_14] : memref<1x1xf32, #tpu.memory_space<smem>>
      memref.store %19, %arg4[%c0_13, %c0_14] : memref<1x1xf32, #tpu.memory_space<smem>>
    } else {
    }
    return
  }
  func.func @transform_0(%arg0: i32, %arg1: i32) -> (i32, i32) {
    %c1_i32 = arith.constant 1 : i32
    %0 = arith.muli %arg0, %c1_i32 : i32
    %1 = arith.addi %0, %arg1 : i32
    %c0_i32 = arith.constant 0 : i32
    %c0_i32_0 = arith.constant 0 : i32
    return %1, %c0_i32 : i32, i32
  }
  func.func @transform_1(%arg0: i32, %arg1: i32) -> (i32, i32) {
    %c1_i32 = arith.constant 1 : i32
    %0 = arith.muli %arg0, %c1_i32 : i32
    %1 = arith.addi %0, %arg1 : i32
    %c0_i32 = arith.constant 0 : i32
    %c0_i32_0 = arith.constant 0 : i32
    return %1, %c0_i32 : i32, i32
  }
  func.func @transform_2(%arg0: i32, %arg1: i32) -> (i32, i32) {
    %c0_i32 = arith.constant 0 : i32
    %c0_i32_0 = arith.constant 0 : i32
    return %arg0, %c0_i32 : i32, i32
  }
}

</mosaic_0001>

<llo_original>
// kernel: _loss_impl.1
$region0: #{_loss_impl.1}
  #allocation0 [shape = 'u32[]', space=smem, size = 0x4, offset = 0x4, fixed_abs, tag = 'smem constant byte address 0x4 - core index']
  #allocation1 [shape = 'u32[144,128]{1,0:T(1,128)}', space=vmem, size = 0x12000, scoped, tag = 'internal scratch']
  #allocation2 [shape = 'f32[8,128]{1,0:T(8,128)}', space=vmem, size = 0x1000, scoped, tag = 'scratch operand']
  %s0 = inlined_call_operand.vmem [shape: f32[16,128], index: 0, kind: input, shape index: {}]
  %s1 = inlined_call_operand.vmem [shape: f32[16,128], index: 1, kind: input, shape index: {}]
  %s2 = inlined_call_operand.hbm [shape: f32[1,1], index: 2, kind: output, shape index: {}]
  %s3 = sld [smem:[#allocation0]]
  $region26: #{_loss_impl.1} parent=0
    _
  %s5 = ssub.s32 1, %s3
  %s6 = scalar_select 0, %s5, %s3
  $region1: #{_loss_impl.1} parent=0
    #allocation3 [shape = 'u8[512]{0}', space=smem, size = 0x200, scoped, tag = 'output window, operand 0, single buffered']
    #allocation4 [shape = 's32[1]{0}', space=sflag, size = 0x4, scoped, tag = 'scoped memory for _loss_impl.1']
    %7 = vsyncpa [#allocation4], 0
    // Predicated region
    $region2: #{_loss_impl.1} parent=1 // pred_check
      _
    $region3: #{_loss_impl.1} parent=1 // pred_check_branch
      %9 = sbr.rel (0) target = $region5
    $region4: #{_loss_impl.1} parent=1 // pred_region
      %s10 = sadd.s32 0, 0
      %s11 = smul.u32 2, %s10
      %p12 = scmp.lt.s32.totalorder %s11, 1
      %s13 = scalar_select %p12, %s11, 1
      %s14 = smul.addr %s13, 8
      %s15 = scalar_lea.vmem %s0, %s14
      %s16 = sadd.s32 0, 0
      %s17 = smul.u32 2, %s16
    $region5: #{_loss_impl.1} parent=1 // pred_fallthru
      _
    // Predicated region
    $region6: #{_loss_impl.1} parent=1 // pred_check
      _
    $region7: #{_loss_impl.1} parent=1 // pred_check_branch
      %19 = sbr.rel (0) target = $region9
    $region8: #{_loss_impl.1} parent=1 // pred_region
      %s20 = sadd.s32 0, 0
      %s21 = smul.u32 2, %s20
      %p22 = scmp.lt.s32.totalorder %s21, 1
      %s23 = scalar_select %p22, %s21, 1
      %s24 = smul.addr %s23, 8
      %s25 = scalar_lea.vmem %s1, %s24
      %s26 = sadd.s32 0, 0
      %s27 = smul.u32 2, %s26
    $region9: #{_loss_impl.1} parent=1 // pred_fallthru
      _
    %s28 = sadd.s32 0, 0
    %s29 = smul.u32 2, %s28
    %p30 = scmp.lt.s32.totalorder %s29, 1
    %s31 = scalar_select %p30, %s29, 1
    %s32 = smul.addr %s31, 8
    %s33 = scalar_lea.vmem %s0, %s32
    %s34 = sadd.s32 0, 0
    %s35 = smul.u32 2, %s34
    %p36 = scmp.lt.s32.totalorder %s35, 1
    %s37 = scalar_select %p36, %s35, 1
    %s38 = smul.addr %s37, 8
    %s39 = scalar_lea.vmem %s1, %s38
    %s40 = sadd.s32 0, 0
    %s41 = smul.u32 2, %s40
    %p42 = scmp.lt.s32.totalorder %s41, 1
    %s43 = scalar_select %p42, %s41, 1
    %s44 = smul.addr %s43, 8
    %s45 = scalar_lea.vmem %s0, %s44
    %s46 = sadd.s32 0, 0
    %s47 = smul.u32 2, %s46
    %s48 = sadd.s32 0, 0
    %s49 = smul.u32 2, %s48
    %p50 = scmp.lt.s32.totalorder %s49, 1
    %s51 = scalar_select %p50, %s49, 1
    %s52 = smul.addr %s51, 8
    %s53 = scalar_lea.vmem %s1, %s52
    %s54 = sadd.s32 0, 0
    %s55 = smul.u32 2, %s54
    %p56 = scmp.eq.s32.totalorder 0, 0
    // Predicated region
    $region10: #{_loss_impl.1} parent=1 // pred_check
      %p57 = pneg %p56
    $region11: #{_loss_impl.1} parent=1 // pred_check_branch
      %59 = sbr.rel (%p57) target = $region13
    $region12: #{_loss_impl.1} parent=1 // pred_region
      %60 = vst [vmem:[#allocation2] sm:$0xff] 0.0
    $region13: #{_loss_impl.1} parent=1 // pred_fallthru
      _
    %v61 = vld [vmem:[%s45] sm:$0xff]
    %v62 = vld [vmem:[%s45 + $0x8] sm:$0xff]
    %v63 = vld [vmem:[%s53] sm:$0xff]
    %v64 = vld [vmem:[%s53 + $0x8] sm:$0xff]
    %v65 = vsub.f32 %v61, %v63
    %v66 = vsub.f32 %v62, %v64
    %v67 = vmul.f32 %v65, %v65
    %v68 = vmul.f32 %v66, %v66
    %v69 = vld [vmem:[#allocation2] sm:$0xff]
    %v70 = vadd.f32 %v67, %v68
    %v71 = vadd.f32 %v69, %v70
    %72 = vst [vmem:[#allocation2] sm:$0xff] %v71
    // Predicated region
    $region14: #{_loss_impl.1} parent=1 // pred_check
      %p73 = pneg %p56
    $region15: #{_loss_impl.1} parent=1 // pred_check_branch
      %75 = sbr.rel (%p73) target = $region17
    $region16: #{_loss_impl.1} parent=1 // pred_region
      %v76 = vld [vmem:[#allocation2] sm:$0xff]
      %77 = vadd.xlane.f32.xlu0 %v76
      %v78 = vpop.xlane.xlu0 %77
      %v79 = vrot.slane %v78, 4
      %v80 = vadd.f32 %v78, %v79
      %v81 = vrot.slane %v80, 2
      %v82 = vadd.f32 %v80, %v81
      %v83 = vrot.slane %v82, 1
      %v84 = vadd.f32 %v82, %v83
      %s85 = vtos %v84
      %s86 = scalar_lea.smem [#allocation3], 0
      %87 = sst [smem:[%s86]] %s85
    $region17: #{_loss_impl.1} parent=1 // pred_fallthru
      _
    // Predicated region
    $region18: #{_loss_impl.1} parent=1 // pred_check
      _
    $region19: #{_loss_impl.1} parent=1 // pred_check_branch
      %89 = sbr.rel (0) target = $region21
    $region20: #{_loss_impl.1} parent=1 // pred_region
      %s91 = ssub.s32 16, 16
      %92 = vsyncadd [#allocation4], %s91
      %95 = dma.smem_to_hbm [#allocation3], 16, %s2, [#allocation4]
    $region21: #{_loss_impl.1} parent=1 // pred_fallthru
      _
    // Predicated region
    $region22: #{_loss_impl.1} parent=1 // pred_check
      _
    $region23: #{_loss_impl.1} parent=1 // pred_check_branch
      %97 = sbr.rel (0) target = $region25
    $region24: #{_loss_impl.1} parent=1 // pred_region
      %98 = dma.done [#allocation4], 16
    $region25: #{_loss_impl.1} parent=1 // pred_fallthru
      _
    %99 = sfence
    %100 = vsyncpa [#allocation4], 1

</llo_original>
